<compile_context>
chip_gen: v5e
topology: v5e:2x2
jax: 0.10.0
libtpu: 0.0.40
codegen_flags: <defaults>
</compile_context>

<pallas_src>
import functools

import jax
import jax.numpy as jnp
from jax import lax
from jax.experimental import pallas as pl
from jax.experimental.pallas import tpu as pltpu


def final_decision_kernel(x_ref, w1_ref, b1_ref, w2_ref, b2_ref,
                          w3_ref, b3_ref, oT_ref, *, tc):
    # x_ref: [tb, in_dim] (native batch-major layout); oT_ref: [out_dim, tb].
    w1 = w1_ref[...]; b1 = b1_ref[...]          # [64, 12], [64, 1]
    w2 = w2_ref[...]; b2 = b2_ref[...]          # [32, 64], [32, 1]
    w3 = w3_ref[...]; b3 = b3_ref[...]          # [ 3, 32], [ 3, 1]

    tb = x_ref.shape[0]
    n_chunks = tb // tc                          # wrapper guarantees tc | tb

    # Unrolled chunk loop: keeps [64, tc] / [32, tc] intermediates in registers
    # instead of spilling tile-sized activations to VMEM.
    for c in range(n_chunks):
        start = c * tc                           # static, lane-aligned offset
        xc = x_ref[pl.ds(start, tc), :].astype(jnp.float32)         # [tc, 12]

        # fc1 + relu: contract x's feature axis directly on the MXU
        # (no wrapper transpose); result keeps batch on the lane axis.
        h1 = lax.dot_general(w1, xc, (((1,), (1,)), ((), ())),
                             preferred_element_type=jnp.float32) + b1  # [64, tc]
        h1 = jnp.maximum(h1, 0.0)

        # fc2 + relu: [32,64] @ [64,tc] -> [32,tc]
        h2 = jnp.dot(w2, h1, preferred_element_type=jnp.float32) + b2
        h2 = jnp.maximum(h2, 0.0)

        # fc3 + softmax over the 3 classes (sublane axis): [3,32]@[32,tc] -> [3,tc]
        logits = jnp.dot(w3, h2, preferred_element_type=jnp.float32) + b3
        m = jnp.max(logits, axis=0, keepdims=True)                   # [1, tc]
        e = jnp.exp(logits - m)
        denom = jnp.sum(e, axis=0, keepdims=True)                    # [1, tc]
        # Reciprocal on the EUP slot instead of a VALU divide.
        probs = e * pl.reciprocal(denom, approx=True)
        oT_ref[:, pl.ds(start, tc)] = probs.astype(oT_ref.dtype)


def final_decision_forward(x, params, *, tb_max=8192, chunk=512, stream_dtype=None):
    """x: [B, input_dim].  params = (w1, b1, w2, b2, w3, b3) with weights in
    PyTorch [out, in] layout and biases shaped [out, 1].  Returns [B, out_dim] f32."""
    w1, b1, w2, b2, w3, b3 = params
    B, in_dim = x.shape
    out_dim = w3.shape[0]

    # --- batch tiling --------------------------------------------------------
    b128 = 128 * pl.cdiv(B, 128)                 # lane-aligned batch
    if b128 <= chunk:
        tb = b128                                # one tile, one chunk
        tc = tb
    else:
        # >=2 grid steps whenever B > chunk (both v7x TCs), tile a multiple of
        # the in-kernel chunk, capped by tb_max for VMEM headroom.
        cap = max(chunk, (tb_max // chunk) * chunk)
        tb = min(cap, chunk * pl.cdiv(pl.cdiv(B, 2), chunk))
        tc = chunk
    n_steps = pl.cdiv(B, tb)
    b_out = n_steps * tb

    # Optional bf16 streaming of x (weights/biases and all activations stay f32).
    if stream_dtype is not None:
        x = x.astype(stream_dtype)

    # Tiny batches only: pad rows so the single block never exceeds the array.
    # Large batches never pad; the partial edge block covers the ragged tail.
    if B < tb:
        x = jnp.pad(x, ((0, tb - B), (0, 0)))

    const = lambda a: pl.BlockSpec(a.shape, lambda i: (0, 0))   # resident in VMEM

    outT = pl.pallas_call(
        functools.partial(final_decision_kernel, tc=tc),
        out_shape=jax.ShapeDtypeStruct((out_dim, b_out), jnp.float32),
        grid=(n_steps,),
        in_specs=[
            pl.BlockSpec((tb, in_dim), lambda i: (i, 0)),       # x: streamed, native layout
            const(w1), const(b1), const(w2), const(b2), const(w3), const(b3),
        ],
        out_specs=pl.BlockSpec((out_dim, tb), lambda i: (0, i)),
        compiler_params=pltpu.CompilerParams(
            dimension_semantics=("parallel",),
            vmem_limit_bytes=32 * 1024 * 1024),
    )(x, w1, b1, w2, b2, w3, b3)

    # [3, b_out] -> [B, 3]; padded / out-of-range columns (if any) are dropped here.
    return outT[:, :B].T


def init_params(key, input_dim=12, output_dim=3):
    # Deterministic init mimicking nn.Linear's uniform(-1/sqrt(fan_in), 1/sqrt(fan_in)),
    # stored in PyTorch layout: W [out, in], b [out, 1].
    def linear(k, fan_in, fan_out):
        kw, kb = jax.random.split(k)
        bound = 1.0 / jnp.sqrt(float(fan_in))
        w = jax.random.uniform(kw, (fan_out, fan_in), jnp.float32, -bound, bound)
        b = jax.random.uniform(kb, (fan_out, 1), jnp.float32, -bound, bound)
        return w, b

    k1, k2, k3 = jax.random.split(key, 3)
    w1, b1 = linear(k1, input_dim, 64)
    w2, b2 = linear(k2, 64, 32)
    w3, b3 = linear(k3, 32, output_dim)
    return (w1, b1, w2, b2, w3, b3)


def reference_forward(x, params):
    w1, b1, w2, b2, w3, b3 = params
    h1 = jnp.maximum(x @ w1.T + b1.T, 0.0)
    h2 = jnp.maximum(h1 @ w2.T + b2.T, 0.0)
    logits = h2 @ w3.T + b3.T
    return jax.nn.softmax(logits, axis=-1)


if __name__ == "__main__":
    key = jax.random.PRNGKey(0)
    k_params, k_x1, k_x2 = jax.random.split(key, 3)

    input_dim, output_dim = 12, 3
    params = init_params(k_params, input_dim=input_dim, output_dim=output_dim)

    # Small shape implied by the module (batch=2, input_dim=12).
    x_small = jax.random.normal(k_x1, (2, input_dim), jnp.float32)
    out_small = jax.block_until_ready(final_decision_forward(x_small, params))
    ref_small = reference_forward(x_small, params)
    assert out_small.shape == (2, output_dim)
    assert jnp.allclose(out_small, ref_small, atol=2e-3, rtol=0.0), "mismatch vs reference (B=2)"
    assert jnp.allclose(jnp.sum(out_small, axis=-1), 1.0, atol=5e-3), "softmax rows must sum to 1"

    # Larger, non-tile-multiple batch: exercises >=2 grid steps, the in-kernel
    # chunk loop, and the partial edge block (no wrapper transpose / full pad).
    x_big = jax.random.normal(k_x2, (1200, input_dim), jnp.float32)
    out_big = jax.block_until_ready(final_decision_forward(x_big, params))
    ref_big = reference_forward(x_big, params)
    assert out_big.shape == (1200, output_dim)
    assert jnp.allclose(out_big, ref_big, atol=2e-3, rtol=0.0), "mismatch vs reference (B=1200)"

    # bf16 streaming path (halves the x HBM stream); activations stay f32 in-kernel.
    out_bf16 = jax.block_until_ready(
        final_decision_forward(x_big, params, stream_dtype=jnp.bfloat16))
    assert out_bf16.shape == (1200, output_dim)
    assert jnp.allclose(out_bf16, ref_big, atol=1e-2, rtol=0.0), "mismatch vs reference (bf16 stream)"

    print("KERNEL_OK")
</pallas_src>

<mosaic_0001>
module attributes {stable_mosaic.version = 11 : i64} {
  func.func @final_decision_kernel(%arg0: i32, %arg1: memref<128x12xf32, #tpu.memory_space<vmem>>, %arg2: memref<64x12xf32, #tpu.memory_space<vmem>>, %arg3: memref<64x1xf32, #tpu.memory_space<vmem>>, %arg4: memref<32x64xf32, #tpu.memory_space<vmem>>, %arg5: memref<32x1xf32, #tpu.memory_space<vmem>>, %arg6: memref<3x32xf32, #tpu.memory_space<vmem>>, %arg7: memref<3x1xf32, #tpu.memory_space<vmem>>, %arg8: memref<3x128xf32, #tpu.memory_space<vmem>>) attributes {dimension_semantics = [#tpu.dimension_semantics<parallel>], iteration_bounds = array<i64: 1>, scalar_prefetch = 0 : i64, scratch_operands = 0 : i64, tpu.core_type = #tpu.core_type<tc>, window_params = [{transform_indices = @transform_0, window_bounds = array<i64: 128, 12>}, {pipeline_mode = #tpu.pipeline_mode<synchronous>, transform_indices = @transform_1, window_bounds = array<i64: 64, 12>}, {pipeline_mode = #tpu.pipeline_mode<synchronous>, transform_indices = @transform_2, window_bounds = array<i64: 64, 1>}, {pipeline_mode = #tpu.pipeline_mode<synchronous>, transform_indices = @transform_3, window_bounds = array<i64: 32, 64>}, {pipeline_mode = #tpu.pipeline_mode<synchronous>, transform_indices = @transform_4, window_bounds = array<i64: 32, 1>}, {pipeline_mode = #tpu.pipeline_mode<synchronous>, transform_indices = @transform_5, window_bounds = array<i64: 3, 32>}, {pipeline_mode = #tpu.pipeline_mode<synchronous>, transform_indices = @transform_6, window_bounds = array<i64: 3, 1>}, {transform_indices = @transform_7, window_bounds = array<i64: 3, 128>}]} {
    %c0 = arith.constant 0 : index
    %c0_0 = arith.constant 0 : index
    %0 = vector.load %arg2[%c0, %c0_0] : memref<64x12xf32, #tpu.memory_space<vmem>>, vector<64x12xf32>
    %c0_1 = arith.constant 0 : index
    %c0_2 = arith.constant 0 : index
    %1 = vector.load %arg3[%c0_1, %c0_2] : memref<64x1xf32, #tpu.memory_space<vmem>>, vector<64x1xf32>
    %c0_3 = arith.constant 0 : index
    %c0_4 = arith.constant 0 : index
    %2 = vector.load %arg4[%c0_3, %c0_4] : memref<32x64xf32, #tpu.memory_space<vmem>>, vector<32x64xf32>
    %c0_5 = arith.constant 0 : index
    %c0_6 = arith.constant 0 : index
    %3 = vector.load %arg5[%c0_5, %c0_6] : memref<32x1xf32, #tpu.memory_space<vmem>>, vector<32x1xf32>
    %c0_7 = arith.constant 0 : index
    %c0_8 = arith.constant 0 : index
    %4 = vector.load %arg6[%c0_7, %c0_8] : memref<3x32xf32, #tpu.memory_space<vmem>>, vector<3x32xf32>
    %c0_9 = arith.constant 0 : index
    %c0_10 = arith.constant 0 : index
    %5 = vector.load %arg7[%c0_9, %c0_10] : memref<3x1xf32, #tpu.memory_space<vmem>>, vector<3x1xf32>
    %c0_11 = arith.constant 0 : index
    %c0_12 = arith.constant 0 : index
    %6 = vector.load %arg1[%c0_11, %c0_12] : memref<128x12xf32, #tpu.memory_space<vmem>>, vector<128x12xf32>
    %cst = arith.constant dense<0.000000e+00> : vector<64x128xf32>
    %7 = tpu.matmul %0, %6, %cst {dimension_numbers = #tpu.dot_dimension_numbers<[1], [1], [0], [0], [0, 0, 1, 0], [], []>} : vector<64x12xf32>, vector<128x12xf32>, vector<64x128xf32> -> vector<64x128xf32>
    %8 = vector.broadcast %1 : vector<64x1xf32> to vector<64x128xf32>
    %9 = arith.addf %7, %8 : vector<64x128xf32>
    %cst_13 = arith.constant 0.000000e+00 : f32
    %10 = vector.broadcast %cst_13 : f32 to vector<64x128xf32>
    %11 = arith.maximumf %9, %10 : vector<64x128xf32>
    %cst_14 = arith.constant dense<0.000000e+00> : vector<32x128xf32>
    %12 = tpu.matmul %2, %11, %cst_14 {dimension_numbers = #tpu.dot_dimension_numbers<[1], [0], [0], [1], [0, 0, 1, 1], [], []>} : vector<32x64xf32>, vector<64x128xf32>, vector<32x128xf32> -> vector<32x128xf32>
    %13 = vector.broadcast %3 : vector<32x1xf32> to vector<32x128xf32>
    %14 = arith.addf %12, %13 : vector<32x128xf32>
    %cst_15 = arith.constant 0.000000e+00 : f32
    %15 = vector.broadcast %cst_15 : f32 to vector<32x128xf32>
    %16 = arith.maximumf %14, %15 : vector<32x128xf32>
    %cst_16 = arith.constant dense<0.000000e+00> : vector<3x128xf32>
    %17 = tpu.matmul %4, %16, %cst_16 {dimension_numbers = #tpu.dot_dimension_numbers<[1], [0], [0], [1], [0, 0, 1, 1], [], []>} : vector<3x32xf32>, vector<32x128xf32>, vector<3x128xf32> -> vector<3x128xf32>
    %18 = vector.broadcast %5 : vector<3x1xf32> to vector<3x128xf32>
    %19 = arith.addf %17, %18 : vector<3x128xf32>
    %cst_17 = arith.constant dense<0xFF800000> : vector<128xf32>
    %20 = vector.multi_reduction <maximumf>, %19, %cst_17 [0] : vector<3x128xf32> to vector<128xf32>
    %21 = vector.shape_cast %20 : vector<128xf32> to vector<1x128xf32>
    %22 = vector.broadcast %21 : vector<1x128xf32> to vector<3x128xf32>
    %23 = arith.subf %19, %22 : vector<3x128xf32>
    %24 = math.exp %23 : vector<3x128xf32>
    %cst_18 = arith.constant dense<0.000000e+00> : vector<128xf32>
    %25 = vector.multi_reduction <add>, %24, %cst_18 [0] : vector<3x128xf32> to vector<128xf32>
    %26 = vector.shape_cast %25 : vector<128xf32> to vector<1x128xf32>
    %27 = tpu.reciprocal %26 {approx = true} : vector<1x128xf32> -> vector<1x128xf32>
    %28 = vector.broadcast %27 : vector<1x128xf32> to vector<3x128xf32>
    %29 = arith.mulf %24, %28 : vector<3x128xf32>
    %c0_19 = arith.constant 0 : index
    %c0_20 = arith.constant 0 : index
    %30 = vector.load %arg8[%c0_19, %c0_20] : memref<3x128xf32, #tpu.memory_space<vmem>>, vector<3x128xf32>
    tpu.vector_store %arg8[%c0_19, %c0_20], %29 {strides = array<i32>} : memref<3x128xf32, #tpu.memory_space<vmem>>, vector<3x128xf32>,
    return
  }
  func.func @transform_0(%arg0: i32) -> (i32, i32) {
    %c0_i32 = arith.constant 0 : i32
    %c0_i32_0 = arith.constant 0 : i32
    return %arg0, %c0_i32 : i32, i32
  }
  func.func @transform_1(%arg0: i32) -> (i32, i32) {
    %c0_i32 = arith.constant 0 : i32
    %c0_i32_0 = arith.constant 0 : i32
    %c0_i32_1 = arith.constant 0 : i32
    return %c0_i32, %c0_i32_0 : i32, i32
  }
  func.func @transform_2(%arg0: i32) -> (i32, i32) {
    %c0_i32 = arith.constant 0 : i32
    %c0_i32_0 = arith.constant 0 : i32
    %c0_i32_1 = arith.constant 0 : i32
    return %c0_i32, %c0_i32_0 : i32, i32
  }
  func.func @transform_3(%arg0: i32) -> (i32, i32) {
    %c0_i32 = arith.constant 0 : i32
    %c0_i32_0 = arith.constant 0 : i32
    %c0_i32_1 = arith.constant 0 : i32
    return %c0_i32, %c0_i32_0 : i32, i32
  }
  func.func @transform_4(%arg0: i32) -> (i32, i32) {
    %c0_i32 = arith.constant 0 : i32
    %c0_i32_0 = arith.constant 0 : i32
    %c0_i32_1 = arith.constant 0 : i32
    return %c0_i32, %c0_i32_0 : i32, i32
  }
  func.func @transform_5(%arg0: i32) -> (i32, i32) {
    %c0_i32 = arith.constant 0 : i32
    %c0_i32_0 = arith.constant 0 : i32
    %c0_i32_1 = arith.constant 0 : i32
    return %c0_i32, %c0_i32_0 : i32, i32
  }
  func.func @transform_6(%arg0: i32) -> (i32, i32) {
    %c0_i32 = arith.constant 0 : i32
    %c0_i32_0 = arith.constant 0 : i32
    %c0_i32_1 = arith.constant 0 : i32
    return %c0_i32, %c0_i32_0 : i32, i32
  }
  func.func @transform_7(%arg0: i32) -> (i32, i32) {
    %c0_i32 = arith.constant 0 : i32
    %c0_i32_0 = arith.constant 0 : i32
    return %c0_i32, %arg0 : i32, i32
  }
}

</mosaic_0001>

<llo_original>
// kernel: tpu_custom_call.1
$region0: #{tpu_custom_call.1}
  #allocation0 [shape = 'u32[]', space=smem, size = 0x4, offset = 0x4, fixed_abs, tag = 'smem constant byte address 0x4 - core index']
  #allocation1 [shape = 'u32[72,128]{1,0:T(1,128)}', space=vmem, size = 0x9000, scoped, tag = 'internal scratch']
  %s0 = inlined_call_operand.vmem [shape: f32[128,12], index: 0, kind: input, shape index: {}]
  %s1 = inlined_call_operand.vmem [shape: f32[64,12], index: 1, kind: input, shape index: {}]
  %s2 = inlined_call_operand.vmem [shape: f32[64,1], index: 2, kind: input, shape index: {}]
  %s3 = inlined_call_operand.vmem [shape: f32[32,64], index: 3, kind: input, shape index: {}]
  %s4 = inlined_call_operand.vmem [shape: f32[32,1], index: 4, kind: input, shape index: {}]
  %s5 = inlined_call_operand.vmem [shape: f32[3,32], index: 5, kind: input, shape index: {}]
  %s6 = inlined_call_operand.vmem [shape: f32[3,1], index: 6, kind: input, shape index: {}]
  %s7 = inlined_call_operand.hbm [shape: f32[3,128], index: 7, kind: output, shape index: {}]
  %s8 = sld [smem:[#allocation0]]
  $region38: #{tpu_custom_call.1} parent=0
    _
  %s10 = ssub.s32 1, %s8
  %s11 = scalar_select 0, %s10, %s8
  $region1: #{tpu_custom_call.1} parent=0
    #allocation2 [shape = 'u8[2048]{0}', space=vmem, size = 0x800, scoped, tag = 'output window, operand 0, single buffered']
    #allocation3 [shape = 's32[1]{0}', space=sflag, size = 0x4, scoped, tag = 'scoped memory for tpu_custom_call.1']
    %12 = vsyncpa [#allocation3], 0
    // Predicated region
    $region2: #{tpu_custom_call.1} parent=1 // pred_check
      _
    $region3: #{tpu_custom_call.1} parent=1 // pred_check_branch
      %14 = sbr.rel (0) target = $region5
    $region4: #{tpu_custom_call.1} parent=1 // pred_region
      _
    $region5: #{tpu_custom_call.1} parent=1 // pred_fallthru
      _
    // Predicated region
    $region6: #{tpu_custom_call.1} parent=1 // pred_check
      _
    $region7: #{tpu_custom_call.1} parent=1 // pred_check_branch
      %16 = sbr.rel (0) target = $region9
    $region8: #{tpu_custom_call.1} parent=1 // pred_region
      _
    $region9: #{tpu_custom_call.1} parent=1 // pred_fallthru
      _
    // Predicated region
    $region10: #{tpu_custom_call.1} parent=1 // pred_check
      _
    $region11: #{tpu_custom_call.1} parent=1 // pred_check_branch
      %18 = sbr.rel (0) target = $region13
    $region12: #{tpu_custom_call.1} parent=1 // pred_region
      _
    $region13: #{tpu_custom_call.1} parent=1 // pred_fallthru
      _
    // Predicated region
    $region14: #{tpu_custom_call.1} parent=1 // pred_check
      _
    $region15: #{tpu_custom_call.1} parent=1 // pred_check_branch
      %20 = sbr.rel (0) target = $region17
    $region16: #{tpu_custom_call.1} parent=1 // pred_region
      _
    $region17: #{tpu_custom_call.1} parent=1 // pred_fallthru
      _
    // Predicated region
    $region18: #{tpu_custom_call.1} parent=1 // pred_check
      _
    $region19: #{tpu_custom_call.1} parent=1 // pred_check_branch
      %22 = sbr.rel (0) target = $region21
    $region20: #{tpu_custom_call.1} parent=1 // pred_region
      _
    $region21: #{tpu_custom_call.1} parent=1 // pred_fallthru
      _
    // Predicated region
    $region22: #{tpu_custom_call.1} parent=1 // pred_check
      _
    $region23: #{tpu_custom_call.1} parent=1 // pred_check_branch
      %24 = sbr.rel (0) target = $region25
    $region24: #{tpu_custom_call.1} parent=1 // pred_region
      _
    $region25: #{tpu_custom_call.1} parent=1 // pred_fallthru
      _
    // Predicated region
    $region26: #{tpu_custom_call.1} parent=1 // pred_check
      _
    $region27: #{tpu_custom_call.1} parent=1 // pred_check_branch
      %26 = sbr.rel (0) target = $region29
    $region28: #{tpu_custom_call.1} parent=1 // pred_region
      _
    $region29: #{tpu_custom_call.1} parent=1 // pred_fallthru
      _
    %v27 = vld [vmem:[%s1] sm:$0xff]
    %v28 = vld [vmem:[%s1 + $0x8] sm:$0xff]
    %v29 = vld [vmem:[%s1 + $0x10] sm:$0xff]
    %v30 = vld [vmem:[%s1 + $0x18] sm:$0xff]
    %v31 = vld [vmem:[%s1 + $0x20] sm:$0xff]
    %v32 = vld [vmem:[%s1 + $0x28] sm:$0xff]
    %v33 = vld [vmem:[%s1 + $0x30] sm:$0xff]
    %v34 = vld [vmem:[%s1 + $0x38] sm:$0xff]
    %v35 = vld [vmem:[%s2] sm:$0xff]
    %v36 = vld [vmem:[%s2 + $0x8] sm:$0xff]
    %v37 = vld [vmem:[%s2 + $0x10] sm:$0xff]
    %v38 = vld [vmem:[%s2 + $0x18] sm:$0xff]
    %v39 = vld [vmem:[%s2 + $0x20] sm:$0xff]
    %v40 = vld [vmem:[%s2 + $0x28] sm:$0xff]
    %v41 = vld [vmem:[%s2 + $0x30] sm:$0xff]
    %v42 = vld [vmem:[%s2 + $0x38] sm:$0xff]
    %v43 = vld [vmem:[%s3] sm:$0xff]
    %v44 = vld [vmem:[%s3 + $0x8] sm:$0xff]
    %v45 = vld [vmem:[%s3 + $0x10] sm:$0xff]
    %v46 = vld [vmem:[%s3 + $0x18] sm:$0xff]
    %v47 = vld [vmem:[%s4] sm:$0xff]
    %v48 = vld [vmem:[%s4 + $0x8] sm:$0xff]
    %v49 = vld [vmem:[%s4 + $0x10] sm:$0xff]
    %v50 = vld [vmem:[%s4 + $0x18] sm:$0xff]
    %v51 = vld [vmem:[%s5] sm:$0x7]
    %v52 = vld [vmem:[%s6] sm:$0x7]
    %v53 = vld [vmem:[%s0] sm:$0xff]
    %v54 = vld [vmem:[%s0 + $0x8] sm:$0xff]
    %v55 = vld [vmem:[%s0 + $0x10] sm:$0xff]
    %v56 = vld [vmem:[%s0 + $0x18] sm:$0xff]
    %v57 = vld [vmem:[%s0 + $0x20] sm:$0xff]
    %v58 = vld [vmem:[%s0 + $0x28] sm:$0xff]
    %v59 = vld [vmem:[%s0 + $0x30] sm:$0xff]
    %v60 = vld [vmem:[%s0 + $0x38] sm:$0xff]
    %v61 = vld [vmem:[%s0 + $0x40] sm:$0xff]
    %v62 = vld [vmem:[%s0 + $0x48] sm:$0xff]
    %v63 = vld [vmem:[%s0 + $0x50] sm:$0xff]
    %v64 = vld [vmem:[%s0 + $0x58] sm:$0xff]
    %v65 = vld [vmem:[%s0 + $0x60] sm:$0xff]
    %v66 = vld [vmem:[%s0 + $0x68] sm:$0xff]
    %v67 = vld [vmem:[%s0 + $0x70] sm:$0xff]
    %v68 = vld [vmem:[%s0 + $0x78] sm:$0xff]
    %70 = vset.pattern.permute.xlu0 0
    %71 = vperm.xlu0 %70, %v35
    %v72 = vpop.permute.xlu0 %71
    %75 = vset.pattern.permute.xlu0 0
    %76 = vperm.xlu0 %75, %v36
    %v77 = vpop.permute.xlu0 %76
    %80 = vset.pattern.permute.xlu0 0
    %81 = vperm.xlu0 %80, %v37
    %v82 = vpop.permute.xlu0 %81
    %85 = vset.pattern.permute.xlu0 0
    %86 = vperm.xlu0 %85, %v38
    %v87 = vpop.permute.xlu0 %86
    %90 = vset.pattern.permute.xlu0 0
    %91 = vperm.xlu0 %90, %v39
    %v92 = vpop.permute.xlu0 %91
    %95 = vset.pattern.permute.xlu0 0
    %96 = vperm.xlu0 %95, %v40
    %v97 = vpop.permute.xlu0 %96
    %100 = vset.pattern.permute.xlu0 0
    %101 = vperm.xlu0 %100, %v41
    %v102 = vpop.permute.xlu0 %101
    %105 = vset.pattern.permute.xlu0 0
    %106 = vperm.xlu0 %105, %v42
    %v107 = vpop.permute.xlu0 %106
    %vm109 = vcmask 97280
    %v111 = vsel %vm109, %v27, 0
    %v114 = vsel %vm109, %v28, 0
    %v117 = vsel %vm109, %v29, 0
    %v120 = vsel %vm109, %v30, 0
    %v123 = vsel %vm109, %v31, 0
    %v126 = vsel %vm109, %v32, 0
    %v129 = vsel %vm109, %v33, 0
    %v132 = vsel %vm109, %v34, 0
    %v135 = vsel %vm109, %v53, 0
    %v138 = vsel %vm109, %v54, 0
    %v141 = vsel %vm109, %v55, 0
    %v144 = vsel %vm109, %v56, 0
    %v147 = vsel %vm109, %v57, 0
    %v150 = vsel %vm109, %v58, 0
    %v153 = vsel %vm109, %v59, 0
    %v156 = vsel %vm109, %v60, 0
    %v159 = vsel %vm109, %v61, 0
    %v162 = vsel %vm109, %v62, 0
    %v165 = vsel %vm109, %v63, 0
    %v168 = vsel %vm109, %v64, 0
    %v171 = vsel %vm109, %v65, 0
    %v174 = vsel %vm109, %v66, 0
    %v177 = vsel %vm109, %v67, 0
    %v180 = vsel %vm109, %v68, 0
    %182 = vmatpush.xpose.msra.mxu0 %v180
    %183 = vmatpush.xpose.msra.mxu0 %v177
    %184 = vmatpush.xpose.msra.mxu0 %v174
    %185 = vmatpush.xpose.msra.mxu0 %v171
    %186 = vmatpush.xpose.msra.mxu0 %v168
    %187 = vmatpush.xpose.msra.mxu0 %v165
    %188 = vmatpush.xpose.msra.mxu0 %v162
    %189 = vmatpush.xpose.msra.mxu0 %v159
    %190 = vmatpush.xpose.msra.mxu0 %v156
    %191 = vmatpush.xpose.msra.mxu0 %v153
    %192 = vmatpush.xpose.msra.mxu0 %v150
    %193 = vmatpush.xpose.msra.mxu0 %v147
    %194 = vmatpush.xpose.msra.mxu0 %v144
    %195 = vmatpush.xpose.msra.mxu0 %v141
    %196 = vmatpush.xpose.msra.mxu0 %v138
    %197 = vmatpush.xpose.msra.mxu0 %v135
    %198 = vmatmul.f32.gmra.mxu0 %v111
    %v199 = vpop.f32.mrf.mxu0
    %v200 = vadd.f32 %v72, %v199
    %201 = vmatmul.f32.gmra.mxu0 %v114
    %v202 = vpop.f32.mrf.mxu0
    %v203 = vadd.f32 %v77, %v202
    %204 = vmatmul.f32.gmra.mxu0 %v117
    %v205 = vpop.f32.mrf.mxu0
    %v206 = vadd.f32 %v82, %v205
    %207 = vmatmul.f32.gmra.mxu0 %v120
    %v208 = vpop.f32.mrf.mxu0
    %v209 = vadd.f32 %v87, %v208
    %210 = vmatmul.f32.gmra.mxu0 %v123
    %v211 = vpop.f32.mrf.mxu0
    %v212 = vadd.f32 %v92, %v211
    %213 = vmatmul.f32.gmra.mxu0 %v126
    %v214 = vpop.f32.mrf.mxu0
    %v215 = vadd.f32 %v97, %v214
    %216 = vmatmul.f32.gmra.mxu0 %v129
    %v217 = vpop.f32.mrf.mxu0
    %v218 = vadd.f32 %v102, %v217
    %219 = vmatmul.f32.gmra.mxu0 %v132
    %v220 = vpop.f32.mrf.mxu0
    %v221 = vadd.f32 %v107, %v220
    %222 = vdwg.mxu0
    %v223 = vmax.f32 %v200, 0.0
    %v224 = vmax.f32 %v203, 0.0
    %v225 = vmax.f32 %v206, 0.0
    %v226 = vmax.f32 %v209, 0.0
    %v227 = vmax.f32 %v212, 0.0
    %v228 = vmax.f32 %v215, 0.0
    %v229 = vmax.f32 %v218, 0.0
    %v230 = vmax.f32 %v221, 0.0
    %232 = vset.pattern.permute.xlu0 0
    %233 = vperm.xlu0 %232, %v47
    %v234 = vpop.permute.xlu0 %233
    %237 = vset.pattern.permute.xlu0 0
    %238 = vperm.xlu0 %237, %v48
    %v239 = vpop.permute.xlu0 %238
    %242 = vset.pattern.permute.xlu0 0
    %243 = vperm.xlu0 %242, %v49
    %v244 = vpop.permute.xlu0 %243
    %247 = vset.pattern.permute.xlu0 0
    %248 = vperm.xlu0 %247, %v50
    %v249 = vpop.permute.xlu0 %248
    %vm251 = vcmask 523264
    %v253 = vsel %vm251, %v43, 0
    %v256 = vsel %vm251, %v44, 0
    %v259 = vsel %vm251, %v45, 0
    %v262 = vsel %vm251, %v46, 0
    %264 = vmatpush.msra.mxu0 0.0
    %265 = vmatpush.msra.mxu0 0.0
    %266 = vmatpush.msra.mxu0 0.0
    %267 = vmatpush.msra.mxu0 0.0
    %268 = vmatpush.msra.mxu0 0.0
    %269 = vmatpush.msra.mxu0 0.0
    %270 = vmatpush.msra.mxu0 0.0
    %271 = vmatpush.msra.mxu0 0.0
    %272 = vmatpush.msra.mxu0 %v230
    %273 = vmatpush.msra.mxu0 %v229
    %274 = vmatpush.msra.mxu0 %v228
    %275 = vmatpush.msra.mxu0 %v227
    %276 = vmatpush.msra.mxu0 %v226
    %277 = vmatpush.msra.mxu0 %v225
    %278 = vmatpush.msra.mxu0 %v224
    %279 = vmatpush.msra.mxu0 %v223
    %280 = vmatmul.f32.gmra.mxu0 %v253
    %v281 = vpop.f32.mrf.mxu0
    %v282 = vadd.f32 %v234, %v281
    %283 = vmatmul.f32.gmra.mxu0 %v256
    %v284 = vpop.f32.mrf.mxu0
    %v285 = vadd.f32 %v239, %v284
    %286 = vmatmul.f32.gmra.mxu0 %v259
    %v287 = vpop.f32.mrf.mxu0
    %v288 = vadd.f32 %v244, %v287
    %289 = vmatmul.f32.gmra.mxu0 %v262
    %v290 = vpop.f32.mrf.mxu0
    %v291 = vadd.f32 %v249, %v290
    %292 = vdwg.mxu0
    %v293 = vmax.f32 %v282, 0.0
    %v294 = vmax.f32 %v285, 0.0
    %v295 = vmax.f32 %v288, 0.0
    %v296 = vmax.f32 %v291, 0.0
    %298 = vset.pattern.permute.xlu0 0
    %299 = vperm.xlu0 %298, %v52
    %v300 = vpop.permute.xlu0 %299
    %vm302 = vcmask 261120
    %v304 = vsel %vm302, %v51, 0
    %306 = vmatpush.msra.mxu0 0.0
    %307 = vmatpush.msra.mxu0 0.0
    %308 = vmatpush.msra.mxu0 0.0
    %309 = vmatpush.msra.mxu0 0.0
    %310 = vmatpush.msra.mxu0 0.0
    %311 = vmatpush.msra.mxu0 0.0
    %312 = vmatpush.msra.mxu0 0.0
    %313 = vmatpush.msra.mxu0 0.0
    %314 = vmatpush.msra.mxu0 0.0
    %315 = vmatpush.msra.mxu0 0.0
    %316 = vmatpush.msra.mxu0 0.0
    %317 = vmatpush.msra.mxu0 0.0
    %318 = vmatpush.msra.mxu0 %v296
    %319 = vmatpush.msra.mxu0 %v295
    %320 = vmatpush.msra.mxu0 %v294
    %321 = vmatpush.msra.mxu0 %v293
    %322 = vmatmul.f32.gmra.mxu0 %v304
    %v323 = vpop.f32.mrf.mxu0
    %v324 = vadd.f32 %v300, %v323
    %325 = vdwg.mxu0
    %vm326 = vcmask 1042432
    %v327 = vsel %vm326, %v324, -inf
    %v328 = vrot.slane %v327, 4
    %v329 = vmax.f32 %v327, %v328
    %v330 = vrot.slane %v329, 2
    %v331 = vmax.f32 %v329, %v330
    %v332 = vrot.slane %v331, 1
    %v333 = vmax.f32 %v331, %v332
    %v334 = vsub.f32 %v324, %v333
    %v335 = vmul.f32 %v334, 1.442695
    %v336 = vpow.pop %v335
    %v337 = vsel %vm326, %v336, 0.0
    %v338 = vrot.slane %v337, 4
    %v339 = vadd.f32 %v337, %v338
    %v340 = vrot.slane %v339, 2
    %v341 = vadd.f32 %v339, %v340
    %v342 = vrot.slane %v341, 1
    %v343 = vadd.f32 %v341, %v342
    %v344 = vrcp.pop %v343
    %v345 = vmul.f32 %v336, %v344
    %346 = vst [vmem:[#allocation2] sm:$0x7] %v345
    // Predicated region
    $region30: #{tpu_custom_call.1} parent=1 // pred_check
      _
    $region31: #{tpu_custom_call.1} parent=1 // pred_check_branch
      %348 = sbr.rel (0) target = $region33
    $region32: #{tpu_custom_call.1} parent=1 // pred_region
      %350 = vsyncadd [#allocation3], 0
      %s352 = sshll.u32 [#allocation2], 4
      %s353 = int_to_ptr.vmem [resolvable:$true] %s352
      %s354 = sshll.u32 %s7, 4
      %s355 = int_to_ptr.hbm [resolvable:$true] %s354
      %357 = dma.vmem_to_hbm [thread:$0]  %s353, 64, %s355, [#allocation3]
    $region33: #{tpu_custom_call.1} parent=1 // pred_fallthru
      _
    // Predicated region
    $region34: #{tpu_custom_call.1} parent=1 // pred_check
      _
    $region35: #{tpu_custom_call.1} parent=1 // pred_check_branch
      %359 = sbr.rel (0) target = $region37
    $region36: #{tpu_custom_call.1} parent=1 // pred_region
      %361 = dma.done [#allocation3], 64
    $region37: #{tpu_custom_call.1} parent=1 // pred_fallthru
      _
    %362 = vsyncpa [#allocation3], 1

</llo_original>
